<compile_context>
chip_gen: v6e
topology: v6e:2x2x1
jax: 0.10.0
libtpu: 0.0.40
codegen_flags: <defaults>
</compile_context>

<pallas_src>
import functools

import jax
import jax.numpy as jnp
from jax.experimental import pallas as pl
from jax.experimental.pallas import tpu as pltpu


# --------------------------------------------------------------------------
# tiling helpers
# --------------------------------------------------------------------------
def _ceil_to(v, m):
    return ((v + m - 1) // m) * m


def _pick_tile(total, unit, cap):
    """Largest multiple of `unit` that divides `total` and is <= cap."""
    best = unit
    t = 2 * unit
    limit = min(total, max(cap, unit))
    while t <= limit:
        if total % t == 0:
            best = t
        t += unit
    return best


def _choose_tiles(r_pad, s_pad, itemsize, block_budget_bytes=1 << 20):
    """Pick (tr, ts): sublane tile first (<=256), then the widest lane tile
    that keeps one block under the byte budget."""
    tr = _pick_tile(r_pad, 8, 256)
    ts_cap = max(128, block_budget_bytes // (tr * itemsize))
    ts = _pick_tile(s_pad, 128, ts_cap)
    return tr, ts


# --------------------------------------------------------------------------
# Pallas kernels
# --------------------------------------------------------------------------
def _stats_kernel(x_ref, sum_ref, sq_ref):
    """Per-row (i.e. per (n, c)) sum and sum-of-squares, accumulated over the
    spatial grid axis (last, serial/'arbitrary')."""
    xb = x_ref[...].astype(jnp.float32)
    psum = jnp.sum(xb, axis=1, keepdims=True)
    psq = jnp.sum(xb * xb, axis=1, keepdims=True)

    @pl.when(pl.program_id(1) == 0)
    def _():
        sum_ref[...] = psum
        sq_ref[...] = psq

    @pl.when(pl.program_id(1) != 0)
    def _():
        sum_ref[...] += psum
        sq_ref[...] += psq


def _affine_kernel(x_ref, s_ref, t_ref, o_ref):
    """Fused normalize + affine: out = x * scale_row + shift_row."""
    o_ref[...] = (x_ref[...].astype(jnp.float32) * s_ref[...]
                  + t_ref[...]).astype(o_ref.dtype)


def _row_stats(x2, tr, ts):
    r_pad, s_pad = x2.shape
    grid = (r_pad // tr, s_pad // ts)
    return pl.pallas_call(
        _stats_kernel,
        out_shape=[jax.ShapeDtypeStruct((r_pad, 1), jnp.float32),
                   jax.ShapeDtypeStruct((r_pad, 1), jnp.float32)],
        grid_spec=pltpu.PrefetchScalarGridSpec(
            num_scalar_prefetch=0,
            grid=grid,
            in_specs=[pl.BlockSpec((tr, ts), lambda i, j: (i, j))],
            out_specs=[pl.BlockSpec((tr, 1), lambda i, j: (i, 0)),
                       pl.BlockSpec((tr, 1), lambda i, j: (i, 0))]),
        compiler_params=pltpu.CompilerParams(
            dimension_semantics=("parallel", "arbitrary")),
    )(x2)


def _row_affine(x2, s_rows, t_rows, tr, ts):
    r_pad, s_pad = x2.shape
    grid = (r_pad // tr, s_pad // ts)
    return pl.pallas_call(
        _affine_kernel,
        out_shape=jax.ShapeDtypeStruct((r_pad, s_pad), x2.dtype),
        grid_spec=pltpu.PrefetchScalarGridSpec(
            num_scalar_prefetch=0,
            grid=grid,
            in_specs=[pl.BlockSpec((tr, ts), lambda i, j: (i, j)),
                      pl.BlockSpec((tr, 1), lambda i, j: (i, 0)),
                      pl.BlockSpec((tr, 1), lambda i, j: (i, 0))],
            out_specs=pl.BlockSpec((tr, ts), lambda i, j: (i, j))),
        compiler_params=pltpu.CompilerParams(
            dimension_semantics=("parallel", "parallel")),
    )(x2, s_rows, t_rows)


# --------------------------------------------------------------------------
# functional forward (jitted once)
# --------------------------------------------------------------------------
@functools.partial(jax.jit, static_argnames=("eps", "training"))
def sync_batchnorm2d(x, gamma, beta, running_mean, running_var, *,
                     eps=1e-5, training=True):
    n, c, h, w = x.shape
    r, s = n * c, h * w
    r_pad, s_pad = _ceil_to(r, 8), _ceil_to(s, 128)
    tr, ts = _choose_tiles(r_pad, s_pad, jnp.dtype(x.dtype).itemsize)

    # pure view: NCHW kept, (n, c) pairs on sublanes, H*W lane-dense
    x2 = x.reshape(r, s)
    if (r_pad, s_pad) != (r, s):
        x2 = jnp.pad(x2, ((0, r_pad - r), (0, s_pad - s)))

    if training:
        rsum, rsq = _row_stats(x2, tr, ts)
        count = jnp.float32(n * h * w)
        csum = rsum[:r, 0].reshape(n, c).sum(axis=0)
        csq = rsq[:r, 0].reshape(n, c).sum(axis=0)
        mean = csum / count
        var = jnp.maximum(csq / count - mean * mean, 0.0)  # biased (F.batch_norm)
    else:
        mean = running_mean.astype(jnp.float32)
        var = running_var.astype(jnp.float32)

    # fold BN into a per-channel affine, expand to per-row (n, c) vectors
    scale = gamma.astype(jnp.float32) * jax.lax.rsqrt(var + eps)
    shift = beta.astype(jnp.float32) - mean * scale
    s_rows = jnp.tile(scale, (n,))
    t_rows = jnp.tile(shift, (n,))
    if r_pad != r:
        s_rows = jnp.pad(s_rows, (0, r_pad - r))
        t_rows = jnp.pad(t_rows, (0, r_pad - r))
    s_rows = s_rows.reshape(r_pad, 1)
    t_rows = t_rows.reshape(r_pad, 1)

    out = _row_affine(x2, s_rows, t_rows, tr, ts)
    if (r_pad, s_pad) != (r, s):
        out = out[:r, :s]
    return out.reshape(n, c, h, w), mean, var


# --------------------------------------------------------------------------
# module-like wrapper mirroring the PyTorch class
# --------------------------------------------------------------------------
class SynchronizedBatchNorm2d:
    def __init__(self, num_features, eps=1e-05, momentum=0.1, affine=True,
                 track_running_stats=True):
        self.num_features = num_features
        self.eps = float(eps)
        self.momentum = float(momentum)
        self.affine = affine
        self.track_running_stats = track_running_stats
        self.weight = jnp.ones((num_features,), jnp.float32)
        self.bias = jnp.zeros((num_features,), jnp.float32)
        self.running_mean = jnp.zeros((num_features,), jnp.float32)
        self.running_var = jnp.ones((num_features,), jnp.float32)
        self.training = True  # PyTorch modules start in training mode

    def train(self, mode=True):
        self.training = mode
        return self

    def eval(self):
        return self.train(False)

    def __call__(self, x):
        gamma = self.weight if self.affine else jnp.ones(
            (self.num_features,), jnp.float32)
        beta = self.bias if self.affine else jnp.zeros(
            (self.num_features,), jnp.float32)
        use_batch_stats = self.training or not self.track_running_stats
        out, bmean, bvar = sync_batchnorm2d(
            x, gamma, beta, self.running_mean, self.running_var,
            eps=self.eps, training=bool(use_batch_stats))
        if self.training and self.track_running_stats:
            # running buffers use the unbiased variance, like torch
            cnt = x.shape[0] * x.shape[2] * x.shape[3]
            unbiased = bvar * (cnt / max(cnt - 1, 1))
            m = self.momentum
            self.running_mean = (1.0 - m) * self.running_mean + m * bmean
            self.running_var = (1.0 - m) * self.running_var + m * unbiased
        return out


# --------------------------------------------------------------------------
# self-test
# --------------------------------------------------------------------------
if __name__ == "__main__":
    key = jax.random.PRNGKey(0)
    kx, kg, kb, km, kv = jax.random.split(key, 5)
    N, C, H, W = 2, 4, 16, 16
    x = jax.random.normal(kx, (N, C, H, W), jnp.float32) * 2.0 + 0.5

    bn = SynchronizedBatchNorm2d(C)
    # non-trivial affine parameters (as a trained network would have)
    bn.weight = jax.random.uniform(kg, (C,), jnp.float32, 0.5, 1.5)
    bn.bias = jax.random.normal(kb, (C,), jnp.float32) * 0.1

    # ---- training mode (default of a freshly constructed module) ----
    out_train = jax.block_until_ready(bn(x))
    mean_ref = x.mean(axis=(0, 2, 3))
    var_ref = x.var(axis=(0, 2, 3))  # biased, matches F.batch_norm
    ref_train = ((x - mean_ref[None, :, None, None])
                 * jax.lax.rsqrt(var_ref[None, :, None, None] + bn.eps)
                 * bn.weight[None, :, None, None]
                 + bn.bias[None, :, None, None])
    assert out_train.shape == x.shape
    assert bool(jnp.all(jnp.isfinite(out_train)))
    assert bool(jnp.allclose(out_train, ref_train, atol=2e-3, rtol=2e-3)), \
        float(jnp.max(jnp.abs(out_train - ref_train)))

    # running-stat update happened
    assert bool(jnp.allclose(bn.running_mean, 0.1 * mean_ref, atol=2e-3))

    # ---- eval mode (running statistics path) ----
    bn.eval()
    bn.running_mean = jax.random.normal(km, (C,), jnp.float32) * 0.2
    bn.running_var = jax.random.uniform(kv, (C,), jnp.float32, 0.5, 2.0)
    out_eval = jax.block_until_ready(bn(x))
    ref_eval = ((x - bn.running_mean[None, :, None, None])
                * jax.lax.rsqrt(bn.running_var[None, :, None, None] + bn.eps)
                * bn.weight[None, :, None, None]
                + bn.bias[None, :, None, None])
    assert bool(jnp.allclose(out_eval, ref_eval, atol=2e-3, rtol=2e-3))

    print("KERNEL_OK")
</pallas_src>

<mosaic_0001>
module attributes {stable_mosaic.version = 11 : i64} {
  func.func @_stats_kernel(%arg0: i32, %arg1: i32, %arg2: memref<8x256xf32, #tpu.memory_space<vmem>>, %arg3: memref<8x1xf32, #tpu.memory_space<vmem>>, %arg4: memref<8x1xf32, #tpu.memory_space<vmem>>) attributes {dimension_semantics = [#tpu.dimension_semantics<parallel>, #tpu.dimension_semantics<arbitrary>], iteration_bounds = array<i64: 1, 1>, scalar_prefetch = 0 : i64, scratch_operands = 0 : i64, tpu.core_type = #tpu.core_type<tc>, window_params = [{transform_indices = @transform_0, window_bounds = array<i64: 8, 256>}, {transform_indices = @transform_1, window_bounds = array<i64: 8, 1>}, {transform_indices = @transform_2, window_bounds = array<i64: 8, 1>}]} {
    %c0 = arith.constant 0 : index
    %c0_0 = arith.constant 0 : index
    %0 = vector.load %arg2[%c0, %c0_0] : memref<8x256xf32, #tpu.memory_space<vmem>>, vector<8x256xf32>
    %cst = arith.constant dense<0.000000e+00> : vector<8xf32>
    %1 = vector.multi_reduction <add>, %0, %cst [1] : vector<8x256xf32> to vector<8xf32>
    %2 = vector.shape_cast %1 : vector<8xf32> to vector<8x1xf32>
    %3 = arith.mulf %0, %0 : vector<8x256xf32>
    %cst_1 = arith.constant dense<0.000000e+00> : vector<8xf32>
    %4 = vector.multi_reduction <add>, %3, %cst_1 [1] : vector<8x256xf32> to vector<8xf32>
    %5 = vector.shape_cast %4 : vector<8xf32> to vector<8x1xf32>
    %c0_i32 = arith.constant 0 : i32
    %6 = arith.cmpi eq, %arg1, %c0_i32 : i32
    %7 = arith.extui %6 : i1 to i32
    %c0_i32_2 = arith.constant 0 : i32
    %8 = arith.cmpi ne, %7, %c0_i32_2 : i32
    scf.if %8 {
      %c0_5 = arith.constant 0 : index
      %c0_6 = arith.constant 0 : index
      %12 = vector.load %arg3[%c0_5, %c0_6] : memref<8x1xf32, #tpu.memory_space<vmem>>, vector<8x1xf32>
      tpu.vector_store %arg3[%c0_5, %c0_6], %2 {strides = array<i32>} : memref<8x1xf32, #tpu.memory_space<vmem>>, vector<8x1xf32>,
      %c0_7 = arith.constant 0 : index
      %c0_8 = arith.constant 0 : index
      %13 = vector.load %arg4[%c0_7, %c0_8] : memref<8x1xf32, #tpu.memory_space<vmem>>, vector<8x1xf32>
      tpu.vector_store %arg4[%c0_7, %c0_8], %5 {strides = array<i32>} : memref<8x1xf32, #tpu.memory_space<vmem>>, vector<8x1xf32>,
    } else {
    }
    %c0_i32_3 = arith.constant 0 : i32
    %9 = arith.cmpi ne, %arg1, %c0_i32_3 : i32
    %10 = arith.extui %9 : i1 to i32
    %c0_i32_4 = arith.constant 0 : i32
    %11 = arith.cmpi ne, %10, %c0_i32_4 : i32
    scf.if %11 {
      %c0_5 = arith.constant 0 : index
      %c0_6 = arith.constant 0 : index
      %12 = vector.load %arg3[%c0_5, %c0_6] : memref<8x1xf32, #tpu.memory_space<vmem>>, vector<8x1xf32>
      %13 = arith.addf %12, %2 : vector<8x1xf32>
      %c0_7 = arith.constant 0 : index
      %c0_8 = arith.constant 0 : index
      %14 = vector.load %arg3[%c0_7, %c0_8] : memref<8x1xf32, #tpu.memory_space<vmem>>, vector<8x1xf32>
      tpu.vector_store %arg3[%c0_7, %c0_8], %13 {strides = array<i32>} : memref<8x1xf32, #tpu.memory_space<vmem>>, vector<8x1xf32>,
      %c0_9 = arith.constant 0 : index
      %c0_10 = arith.constant 0 : index
      %15 = vector.load %arg4[%c0_9, %c0_10] : memref<8x1xf32, #tpu.memory_space<vmem>>, vector<8x1xf32>
      %16 = arith.addf %15, %5 : vector<8x1xf32>
      %c0_11 = arith.constant 0 : index
      %c0_12 = arith.constant 0 : index
      %17 = vector.load %arg4[%c0_11, %c0_12] : memref<8x1xf32, #tpu.memory_space<vmem>>, vector<8x1xf32>
      tpu.vector_store %arg4[%c0_11, %c0_12], %16 {strides = array<i32>} : memref<8x1xf32, #tpu.memory_space<vmem>>, vector<8x1xf32>,
    } else {
    }
    return
  }
  func.func @transform_0(%arg0: i32, %arg1: i32) -> (i32, i32) {
    %c0_i32 = arith.constant 0 : i32
    return %arg0, %arg1 : i32, i32
  }
  func.func @transform_1(%arg0: i32, %arg1: i32) -> (i32, i32) {
    %c0_i32 = arith.constant 0 : i32
    %c0_i32_0 = arith.constant 0 : i32
    return %arg0, %c0_i32 : i32, i32
  }
  func.func @transform_2(%arg0: i32, %arg1: i32) -> (i32, i32) {
    %c0_i32 = arith.constant 0 : i32
    %c0_i32_0 = arith.constant 0 : i32
    return %arg0, %c0_i32 : i32, i32
  }
}

module attributes {stable_mosaic.version = 11 : i64} {
  func.func @_affine_kernel(%arg0: i32, %arg1: i32, %arg2: memref<8x256xf32, #tpu.memory_space<vmem>>, %arg3: memref<8x1xf32, #tpu.memory_space<vmem>>, %arg4: memref<8x1xf32, #tpu.memory_space<vmem>>, %arg5: memref<8x256xf32, #tpu.memory_space<vmem>>) attributes {dimension_semantics = [#tpu.dimension_semantics<parallel>, #tpu.dimension_semantics<parallel>], iteration_bounds = array<i64: 1, 1>, scalar_prefetch = 0 : i64, scratch_operands = 0 : i64, tpu.core_type = #tpu.core_type<tc>, window_params = [{transform_indices = @transform_0, window_bounds = array<i64: 8, 256>}, {transform_indices = @transform_1, window_bounds = array<i64: 8, 1>}, {transform_indices = @transform_2, window_bounds = array<i64: 8, 1>}, {transform_indices = @transform_3, window_bounds = array<i64: 8, 256>}]} {
    %c0 = arith.constant 0 : index
    %c0_0 = arith.constant 0 : index
    %0 = vector.load %arg2[%c0, %c0_0] : memref<8x256xf32, #tpu.memory_space<vmem>>, vector<8x256xf32>
    %c0_1 = arith.constant 0 : index
    %c0_2 = arith.constant 0 : index
    %1 = vector.load %arg3[%c0_1, %c0_2] : memref<8x1xf32, #tpu.memory_space<vmem>>, vector<8x1xf32>
    %2 = vector.broadcast %1 : vector<8x1xf32> to vector<8x256xf32>
    %3 = arith.mulf %0, %2 : vector<8x256xf32>
    %c0_3 = arith.constant 0 : index
    %c0_4 = arith.constant 0 : index
    %4 = vector.load %arg4[%c0_3, %c0_4] : memref<8x1xf32, #tpu.memory_space<vmem>>, vector<8x1xf32>
    %5 = vector.broadcast %4 : vector<8x1xf32> to vector<8x256xf32>
    %6 = arith.addf %3, %5 : vector<8x256xf32>
    %c0_5 = arith.constant 0 : index
    %c0_6 = arith.constant 0 : index
    %7 = vector.load %arg5[%c0_5, %c0_6] : memref<8x256xf32, #tpu.memory_space<vmem>>, vector<8x256xf32>
    tpu.vector_store %arg5[%c0_5, %c0_6], %6 {strides = array<i32>} : memref<8x256xf32, #tpu.memory_space<vmem>>, vector<8x256xf32>,
    return
  }
  func.func @transform_0(%arg0: i32, %arg1: i32) -> (i32, i32) {
    %c0_i32 = arith.constant 0 : i32
    return %arg0, %arg1 : i32, i32
  }
  func.func @transform_1(%arg0: i32, %arg1: i32) -> (i32, i32) {
    %c0_i32 = arith.constant 0 : i32
    %c0_i32_0 = arith.constant 0 : i32
    return %arg0, %c0_i32 : i32, i32
  }
  func.func @transform_2(%arg0: i32, %arg1: i32) -> (i32, i32) {
    %c0_i32 = arith.constant 0 : i32
    %c0_i32_0 = arith.constant 0 : i32
    return %arg0, %c0_i32 : i32, i32
  }
  func.func @transform_3(%arg0: i32, %arg1: i32) -> (i32, i32) {
    %c0_i32 = arith.constant 0 : i32
    return %arg0, %arg1 : i32, i32
  }
}

</mosaic_0001>

<llo_original>
// kernel: squeeze.2
$region0: #{squeeze.2}
  %s0 = inlined_call_operand.vmem [shape: f32[8], index: 0, kind: input, shape index: {}]
  %s1 = inlined_call_operand.vmem [shape: f32[2,4], index: 1, kind: output, shape index: {}]
  $region1: #{squeeze.2} parent=0
    #allocation0 [shape = 'u8[4096]{0}', space=vmem, size = 0x1000, scoped, tag = 'scoped mem for output reshape']
    #allocation1 [shape = 'u8[4096]{0}', space=vmem, size = 0x1000, scoped, tag = 'scoped mem for input reshape']
    %s3 = sshll.u32 1, 1
    %s4 = ssub.s32 %s3, 1
    %v5 = vld [vmem:[%s0] sm:%s4]
    %6 = vst [vmem:[#allocation1] sm:%s4] %v5
    %v7 = vld [vmem:[#allocation1] sm:$0x1]
    %vm8 = vcmask 31744
    %9 = vst.msk [vmem:[#allocation0] sm:$0x1] %vm8, %v7
    %v10 = vld [vmem:[#allocation1] sm:$0x1]
    %11 = vrot.lane.b32.xlu0 %v10, 124
    %v12 = vpop.permute.xlu0 %11
    %vm13 = vcmask 31744
    %s14 = scalar_lea.vmem [#allocation0], 1
    %15 = vst.msk [vmem:[%s14] sm:$0x1] %vm13, %v12
    %s17 = sshll.u32 1, 2
    %s18 = ssub.s32 %s17, 1
    %v20 = vld [vmem:[#allocation0] sm:%s18]
    %s21 = sshll.u32 1, 2
    %s22 = ssub.s32 %s21, 1
    %23 = vst [vmem:[%s1] sm:%s22] %v20

// kernel: tile.17
$region0: #{tile.17}
  #allocation0 [shape = 's32[1]{0}', space=sflag, size = 0x4, scoped, tag = 'scoped memory for tile.17']
  %s0 = inlined_call_operand.vmem [shape: f32[4], index: 0, kind: input, shape index: {}]
  %s1 = inlined_call_operand.vmem [shape: f32[2,4], index: 1, kind: output, shape index: {}]
  // Predicated region
  $region2: #{tile.17} parent=0 // pred_check
    _
  $region3: #{tile.17} parent=0 // pred_check_branch
    %3 = sbr.rel (0) target = $region5
  $region4: #{tile.17} parent=0 // pred_region
    _
  $region5: #{tile.17} parent=0 // pred_fallthru
    _
  %v4 = vld [vmem:[%s0] ss:$0 sm:$0xff]
  %5 = vst [vmem:[%s1] sm:$0x3] %v4

// kernel: tile.0
$region0: #{tile.0}
  %s0 = inlined_call_operand.vmem [shape: f32[2,4], index: 0, kind: input, shape index: {}]
  %s1 = inlined_call_operand.vmem [shape: f32[8,1], index: 1, kind: output, shape index: {}]
  $region1: #{tile.0} parent=0
    #allocation0 [shape = 'u8[4096]{0}', space=vmem, size = 0x1000, scoped, tag = 'scoped mem for input reshape']
    %s3 = sshll.u32 1, 2
    %s4 = ssub.s32 %s3, 1
    %v5 = vld [vmem:[%s0] sm:%s4]
    %6 = vst [vmem:[#allocation0] sm:%s4] %v5
    %v7 = vld [vmem:[#allocation0] sm:$0x3]
    %vm8 = vcmask 7168
    %9 = vst.msk [vmem:[%s1] ss:$4 sm:$0x3] %vm8, %v7
    %v10 = vld [vmem:[#allocation0] sm:$0x3]
    %11 = vrot.lane.b32.xlu0 %v10, 127
    %v12 = vpop.permute.xlu0 %11
    %vm13 = vcmask 7168
    %s14 = scalar_lea.vmem %s1, 1
    %15 = vst.msk [vmem:[%s14] ss:$4 sm:$0x3] %vm13, %v12
    %v16 = vld [vmem:[#allocation0] sm:$0x3]
    %17 = vrot.lane.b32.xlu0 %v16, 126
    %v18 = vpop.permute.xlu0 %17
    %vm19 = vcmask 7168
    %s20 = scalar_lea.vmem %s1, 2
    %21 = vst.msk [vmem:[%s20] ss:$4 sm:$0x3] %vm19, %v18
    %v22 = vld [vmem:[#allocation0] sm:$0x3]
    %23 = vrot.lane.b32.xlu0 %v22, 125
    %v24 = vpop.permute.xlu0 %23
    %vm25 = vcmask 7168
    %s26 = scalar_lea.vmem %s1, 3
    %27 = vst.msk [vmem:[%s26] ss:$4 sm:$0x3] %vm25, %v24

// kernel: sync_batchnorm2d.3
$region0: #{sync_batchnorm2d.3}
  #allocation0 [shape = 'u32[]', space=smem, size = 0x4, offset = 0x4, fixed_abs, tag = 'smem constant byte address 0x4 - core index']
  #allocation1 [shape = 'u32[144,128]{1,0:T(1,128)}', space=vmem, size = 0x12000, scoped, tag = 'internal scratch']
  %s0 = inlined_call_operand.vmem [shape: f32[8,256], index: 0, kind: input, shape index: {}]
  %s1 = inlined_call_operand.vmem [shape: f32[8,1], index: 1, kind: input, shape index: {}]
  %s2 = inlined_call_operand.vmem [shape: f32[8,1], index: 2, kind: input, shape index: {}]
  %s3 = inlined_call_operand.vmem [shape: f32[8,256], index: 3, kind: output, shape index: {}]
  %s4 = sld [smem:[#allocation0]]
  $region22: #{sync_batchnorm2d.3} parent=0
    _
  %s6 = ssub.s32 1, %s4
  %s7 = scalar_select 0, %s6, %s4
  // Predicated region
  $region2: #{sync_batchnorm2d.3} parent=0 // pred_check
    _
  $region3: #{sync_batchnorm2d.3} parent=0 // pred_check_branch
    %9 = sbr.rel (0) target = $region5
  $region4: #{sync_batchnorm2d.3} parent=0 // pred_region
    _
  $region5: #{sync_batchnorm2d.3} parent=0 // pred_fallthru
    _
  // Predicated region
  $region6: #{sync_batchnorm2d.3} parent=0 // pred_check
    _
  $region7: #{sync_batchnorm2d.3} parent=0 // pred_check_branch
    %11 = sbr.rel (0) target = $region9
  $region8: #{sync_batchnorm2d.3} parent=0 // pred_region
    _
  $region9: #{sync_batchnorm2d.3} parent=0 // pred_fallthru
    _
  // Predicated region
  $region10: #{sync_batchnorm2d.3} parent=0 // pred_check
    _
  $region11: #{sync_batchnorm2d.3} parent=0 // pred_check_branch
    %13 = sbr.rel (0) target = $region13
  $region12: #{sync_batchnorm2d.3} parent=0 // pred_region
    _
  $region13: #{sync_batchnorm2d.3} parent=0 // pred_fallthru
    _
  %v14 = vld [vmem:[%s0] sm:$0xff]
  %v15 = vld [vmem:[%s0 + $0x8] sm:$0xff]
  %v16 = vld [vmem:[%s1] sm:$0xff]
  %18 = vset.pattern.permute.xlu0 0
  %19 = vperm.xlu0 %18, %v16
  %v20 = vpop.permute.xlu0 %19
  %v22 = vmul.f32 %v14, %v20
  %v23 = vmul.f32 %v15, %v20
  %v24 = vld [vmem:[%s2] sm:$0xff]
  %26 = vset.pattern.permute.xlu0 0
  %27 = vperm.xlu0 %26, %v24
  %v28 = vpop.permute.xlu0 %27
  %v30 = vadd.f32 %v22, %v28
  %v31 = vadd.f32 %v23, %v28
  %32 = vst [vmem:[%s3] sm:$0xff] %v30
  %33 = vst [vmem:[%s3 + $0x8] sm:$0xff] %v31
  // Predicated region
  $region14: #{sync_batchnorm2d.3} parent=0 // pred_check
    _
  $region15: #{sync_batchnorm2d.3} parent=0 // pred_check_branch
    %35 = sbr.rel (0) target = $region17
  $region16: #{sync_batchnorm2d.3} parent=0 // pred_region
    _
  $region17: #{sync_batchnorm2d.3} parent=0 // pred_fallthru
    _
  // Predicated region
  $region18: #{sync_batchnorm2d.3} parent=0 // pred_check
    _
  $region19: #{sync_batchnorm2d.3} parent=0 // pred_check_branch
    %37 = sbr.rel (0) target = $region21
  $region20: #{sync_batchnorm2d.3} parent=0 // pred_region
    _
  $region21: #{sync_batchnorm2d.3} parent=0 // pred_fallthru
    _

// kernel: sync_batchnorm2d.2
$region0: #{sync_batchnorm2d.2}
  #allocation0 [shape = 'u32[]', space=smem, size = 0x4, offset = 0x4, fixed_abs, tag = 'smem constant byte address 0x4 - core index']
  #allocation1 [shape = 'u32[144,128]{1,0:T(1,128)}', space=vmem, size = 0x12000, scoped, tag = 'internal scratch']
  %s0 = inlined_call_operand.vmem [shape: f32[8,256], index: 0, kind: input, shape index: {}]
  %s1 = inlined_call_operand.vmem [shape: f32[8,1], index: 1, kind: output, shape index: {0}]
  %s2 = inlined_call_operand.vmem [shape: f32[8,1], index: 2, kind: output, shape index: {1}]
  %3 = xla_tuple %s1, %s2
  %s4 = sld [smem:[#allocation0]]
  $region30: #{sync_batchnorm2d.2} parent=0
    _
  %s6 = ssub.s32 1, %s4
  %s7 = scalar_select 0, %s6, %s4
  // Predicated region
  $region2: #{sync_batchnorm2d.2} parent=0 // pred_check
    _
  $region3: #{sync_batchnorm2d.2} parent=0 // pred_check_branch
    %9 = sbr.rel (0) target = $region5
  $region4: #{sync_batchnorm2d.2} parent=0 // pred_region
    _
  $region5: #{sync_batchnorm2d.2} parent=0 // pred_fallthru
    _
  %v10 = vld [vmem:[%s0] sm:$0xff]
  %v11 = vld [vmem:[%s0 + $0x8] sm:$0xff]
  %v12 = vadd.f32 %v10, %v11
  %13 = vadd.xlane.f32.xlu0 %v12
  %v14 = vpop.xlane.xlu0 %13
  %v15 = vmul.f32 %v10, %v10
  %v16 = vmul.f32 %v11, %v11
  %v17 = vadd.f32 %v15, %v16
  %18 = vadd.xlane.f32.xlu0 %v17
  %v19 = vpop.xlane.xlu0 %18
  %p20 = scmp.eq.s32.totalorder 0, 0
  // Predicated region
  $region6: #{sync_batchnorm2d.2} parent=0 // pred_check
    %p21 = pneg %p20
  $region7: #{sync_batchnorm2d.2} parent=0 // pred_check_branch
    %23 = sbr.rel (%p21) target = $region9
  $region8: #{sync_batchnorm2d.2} parent=0 // pred_region
    %vm24 = vcmask 7168
    %25 = vst.msk [vmem:[%s1] sm:$0xff] %vm24, %v14
    %26 = vst.msk [vmem:[%s2] sm:$0xff] %vm24, %v19
  $region9: #{sync_batchnorm2d.2} parent=0 // pred_fallthru
    _
  %p27 = scmp.ne.s32.totalorder 0, 0
  // Predicated region
  $region10: #{sync_batchnorm2d.2} parent=0 // pred_check
    %p28 = pneg %p27
  $region11: #{sync_batchnorm2d.2} parent=0 // pred_check_branch
    %30 = sbr.rel (%p28) target = $region13
  $region12: #{sync_batchnorm2d.2} parent=0 // pred_region
    %v31 = vld [vmem:[%s1] sm:$0xff]
    %v32 = vadd.f32 %v31, %v14
    %vm33 = vcmask 7168
    %34 = vst.msk [vmem:[%s1] sm:$0xff] %vm33, %v32
    %v35 = vld [vmem:[%s2] sm:$0xff]
    %v36 = vadd.f32 %v35, %v19
    %37 = vst.msk [vmem:[%s2] sm:$0xff] %vm33, %v36
  $region13: #{sync_batchnorm2d.2} parent=0 // pred_fallthru
    _
  // Predicated region
  $region14: #{sync_batchnorm2d.2} parent=0 // pred_check
    _
  $region15: #{sync_batchnorm2d.2} parent=0 // pred_check_branch
    %39 = sbr.rel (0) target = $region17
  $region16: #{sync_batchnorm2d.2} parent=0 // pred_region
    _
  $region17: #{sync_batchnorm2d.2} parent=0 // pred_fallthru
    _
  // Predicated region
  $region18: #{sync_batchnorm2d.2} parent=0 // pred_check
    _
  $region19: #{sync_batchnorm2d.2} parent=0 // pred_check_branch
    %41 = sbr.rel (0) target = $region21
  $region20: #{sync_batchnorm2d.2} parent=0 // pred_region
    _
  $region21: #{sync_batchnorm2d.2} parent=0 // pred_fallthru
    _
  // Predicated region
  $region22: #{sync_batchnorm2d.2} parent=0 // pred_check
    _
  $region23: #{sync_batchnorm2d.2} parent=0 // pred_check_branch
    %43 = sbr.rel (0) target = $region25
  $region24: #{sync_batchnorm2d.2} parent=0 // pred_region
    _
  $region25: #{sync_batchnorm2d.2} parent=0 // pred_fallthru
    _
  // Predicated region
  $region26: #{sync_batchnorm2d.2} parent=0 // pred_check
    _
  $region27: #{sync_batchnorm2d.2} parent=0 // pred_check_branch
    %45 = sbr.rel (0) target = $region29
  $region28: #{sync_batchnorm2d.2} parent=0 // pred_region
    _
  $region29: #{sync_batchnorm2d.2} parent=0 // pred_fallthru
    _

</llo_original>
